<compile_context>
chip_gen: v6e
topology: v6e:2x2x1
jax: 0.10.0
libtpu: 0.0.40
codegen_flags: <defaults>
</compile_context>

<pallas_src>
import functools
import math

import jax
import jax.numpy as jnp
from jax.experimental import pallas as pl
from jax.experimental.pallas import tpu as pltpu

_LOG2E = 1.4426950408889634
_MASK_FACTOR = -1.0e9  # matches the reference's `mask * -1000000000.0`


def _pick_tile(dim, target, align):
    """Largest multiple of `align` that divides `dim` and is <= target, else `dim`."""
    if dim <= target:
        return dim
    t = (target // align) * align
    while t >= align:
        if dim % t == 0:
            return t
        t -= align
    return dim  # full dimension is always a legal block


def _head_group(num_heads, head_dim):
    """How many heads to batch per grid step (aim for ~128 lanes of head_dim work)."""
    g = max(1, 128 // max(head_dim, 1))
    g = min(g, num_heads)
    while num_heads % g:
        g -= 1
    return g


def _sublane_align(dtype):
    return {4: 8, 2: 16, 1: 32}.get(jnp.dtype(dtype).itemsize, 8)


def _make_flash_kernel(qscale, mask_mode, compute_dtype, approx_recip):
    """mask_mode: None | 'bh' (mask broadcast over heads) | 'ph' (per-head mask)."""

    def kernel(*refs):
        if mask_mode is None:
            q_ref, k_ref, v_ref, o_ref, qs_sc, m_sc, l_sc, acc_sc = refs
            mask_ref = None
        else:
            q_ref, k_ref, v_ref, mask_ref, o_ref, qs_sc, m_sc, l_sc, acc_sc = refs

        kv = pl.program_id(2)

        @pl.when(kv == 0)
        def _():
            # Hoist the query scaling out of the kv loop: the q block's index
            # does not depend on kv, so it stays resident; scale it once.
            # 1/sqrt(d_k) * log2(e) is folded in so the softmax uses exp2.
            qs_sc[...] = (q_ref[...].astype(jnp.float32) * qscale).astype(compute_dtype)
            m_sc[...] = jnp.full(m_sc.shape, -jnp.inf, dtype=m_sc.dtype)
            l_sc[...] = jnp.zeros(l_sc.shape, l_sc.dtype)
            acc_sc[...] = jnp.zeros(acc_sc.shape, acc_sc.dtype)

        k = k_ref[...].astype(compute_dtype)

        # Per-head QK^T batched over the G heads of this step (contraction on D,
        # no explicit transpose); f32 accumulation on the MXU.
        s = jnp.einsum("gqd,gkd->gqk", qs_sc[...], k,
                       preferred_element_type=jnp.float32)

        if mask_mode is not None:
            # Reference semantics: scores += mask * -1e9 (in natural-log space);
            # here scores live in log2 space, so the constant carries log2(e).
            bias = mask_ref[...].astype(jnp.float32) * (_MASK_FACTOR * _LOG2E)
            s = s + bias  # (tq, tk) broadcasts over the G heads in 'bh' mode

        # Online softmax update (all exponentials in base 2 -> single EUP op,
        # no extra VPU multiply by log2e per step).
        m_prev = m_sc[...]
        m_new = jnp.maximum(m_prev, jnp.max(s, axis=-1, keepdims=True))
        alpha = jnp.exp2(m_prev - m_new)
        p = jnp.exp2(s - m_new)
        l_sc[...] = alpha * l_sc[...] + jnp.sum(p, axis=-1, keepdims=True)
        acc_sc[...] = alpha * acc_sc[...] + jnp.einsum(
            "gqk,gkd->gqd",
            p.astype(compute_dtype),
            v_ref[...].astype(compute_dtype),
            preferred_element_type=jnp.float32)
        m_sc[...] = m_new

        @pl.when(kv == pl.num_programs(2) - 1)
        def _():
            inv = pl.reciprocal(l_sc[...], approx=approx_recip)
            o_ref[...] = (acc_sc[...] * inv).astype(o_ref.dtype)

    return kernel


def _sdpa_impl(query, key, value, attention_mask, use_bf16_matmul):
    B, H, S, D = query.shape
    out_dtype = query.dtype
    compute_dtype = jnp.bfloat16 if use_bf16_matmul else query.dtype

    # Group G heads per grid step (for D < 128) to batch MXU work and amortize
    # per-step overhead; G always divides H.
    G = _head_group(H, D)
    Hg = H // G

    qscale = (1.0 / math.sqrt(D)) * _LOG2E

    # ---- tile selection ---------------------------------------------------
    try:
        vmem_cap = int(getattr(pltpu.get_tpu_info(), "vmem_capacity_bytes"))
    except Exception:
        vmem_cap = 64 * 1024 * 1024  # v7x-safe fallback
    # Total q rows per grid step across the G grouped heads.
    row_budget = 2048 if vmem_cap >= 96 * 1024 * 1024 else 1024
    tq = _pick_tile(S, max(128, row_budget // G), _sublane_align(compute_dtype))
    # tk is the lane dim of the (tq, tk) scores/probs tiles and the PV
    # contraction depth -> keep it a multiple of 128 (or full S).
    tk = _pick_tile(S, 512, 128)
    n_q = S // tq
    n_kv = S // tk

    # Flatten (B, H); grid axis 0 walks head-groups of size G.
    q3 = query.reshape(B * H, S, D)
    k3 = key.reshape(B * H, S, D)
    v3 = value.reshape(B * H, S, D)

    qo_spec = pl.BlockSpec((G, tq, D), lambda b, i, j: (b, i, 0))
    kv_spec = pl.BlockSpec((G, tk, D), lambda b, i, j: (b, j, 0))

    in_specs = [qo_spec, kv_spec, kv_spec]
    args = [q3, k3, v3]

    mask_mode = None
    mask_group = 1
    if attention_mask is not None:
        m = jnp.asarray(attention_mask)
        while m.ndim < 4:
            m = m[None]
        if m.shape[-2] != S or m.shape[-1] != S:
            # Only broadcast the (small) sequence dims; batch/head broadcasting
            # is handled for free in the index_map below.
            m = jnp.broadcast_to(m, m.shape[:-2] + (S, S))
        Bm, Hm = m.shape[0], m.shape[1]
        if Bm not in (1, B) or Hm not in (1, H):
            raise ValueError(
                f"attention_mask shape {attention_mask.shape} is not "
                f"broadcastable to {(B, H, S, S)}")
        # Stream the mask as bf16 (halves HBM bytes; exact for 0/1 masks).
        if m.dtype != jnp.dtype(jnp.bfloat16):
            m = m.astype(jnp.bfloat16)

        if Hm == 1:
            mask_mode = "bh"  # one (tq, tk) mask tile shared by all G heads
            if Bm == 1:
                mask_spec = pl.BlockSpec((None, None, tq, tk),
                                         lambda b, i, j: (0, 0, i, j))
            else:
                mask_spec = pl.BlockSpec((None, None, tq, tk),
                                         lambda b, i, j: (b // Hg, 0, i, j))
        else:
            mask_mode = "ph"  # per-head (G, tq, tk) mask tile
            mask_group = G
            if Bm == 1:
                mask_spec = pl.BlockSpec((None, G, tq, tk),
                                         lambda b, i, j: (0, b % Hg, i, j))
            else:
                mask_spec = pl.BlockSpec((None, G, tq, tk),
                                         lambda b, i, j: (b // Hg, b % Hg, i, j))
        in_specs.append(mask_spec)
        args.append(m)

    scratch_shapes = [
        pltpu.VMEM((G, tq, D), compute_dtype),  # scaled Q (hoisted out of kv loop)
        pltpu.VMEM((G, tq, 1), jnp.float32),    # running max (log2 space)
        pltpu.VMEM((G, tq, 1), jnp.float32),    # running sum
        pltpu.VMEM((G, tq, D), jnp.float32),    # output accumulator
    ]

    # ---- scoped-VMEM budget (instead of a hardcoded 48 MiB) ----------------
    in_item = jnp.dtype(query.dtype).itemsize
    cd_item = jnp.dtype(compute_dtype).itemsize
    blk_bytes = (2 * G * tq * D * in_item            # q, double buffered
                 + 4 * G * tk * D * in_item          # k + v, double buffered
                 + 2 * G * tq * D * jnp.dtype(out_dtype).itemsize)  # out
    if mask_mode is not None:
        blk_bytes += 2 * mask_group * tq * tk * 2    # bf16 mask, double buffered
    scratch_bytes = (G * tq * D * 4 + 2 * G * tq * 4 + G * tq * D * cd_item)
    interm_bytes = 4 * G * tq * tk * 4               # scores/probs temporaries
    est = blk_bytes + scratch_bytes + interm_bytes
    vmem_limit = int(min(max(2 * est + (8 << 20), 32 << 20),
                         int(0.9 * vmem_cap)))

    kernel = _make_flash_kernel(
        qscale, mask_mode, compute_dtype,
        approx_recip=(jnp.dtype(out_dtype) != jnp.dtype(jnp.float32)))

    out = pl.pallas_call(
        kernel,
        out_shape=jax.ShapeDtypeStruct((B * H, S, D), out_dtype),
        grid_spec=pltpu.PrefetchScalarGridSpec(
            num_scalar_prefetch=0,
            grid=(B * Hg, n_q, n_kv),
            in_specs=in_specs,
            out_specs=qo_spec,
            scratch_shapes=scratch_shapes,
        ),
        compiler_params=pltpu.CompilerParams(
            dimension_semantics=("parallel", "parallel", "arbitrary"),
            vmem_limit_bytes=vmem_limit,
        ),
    )(*args)
    return out.reshape(B, H, S, D)


@functools.partial(jax.jit, static_argnames=("use_bf16_matmul",))
def scaled_dot_product_attention(query, key, value, attention_mask=None, *,
                                 use_bf16_matmul=False):
    """Pallas implementation of the PyTorch ScaledDotProductAttention.forward."""
    return _sdpa_impl(query, key, value, attention_mask, use_bf16_matmul)


def _reference_sdpa(query, key, value, attention_mask=None):
    d_k = query.shape[-1]
    scores = jnp.matmul(query, jnp.swapaxes(key, -1, -2)) / jnp.sqrt(
        jnp.float32(d_k))
    if attention_mask is not None:
        scores = scores + attention_mask * -1000000000.0
    probs = jax.nn.softmax(scores, axis=-1)
    return jnp.matmul(probs, value)


if __name__ == "__main__":
    # Small shapes: batch=2, heads=2, seq=8, head_dim=32
    B, H, S, D = 2, 2, 8, 32
    key0 = jax.random.PRNGKey(0)
    kq, kk, kv, km = jax.random.split(key0, 4)

    query = jax.random.normal(kq, (B, H, S, D), dtype=jnp.float32)
    key_ = jax.random.normal(kk, (B, H, S, D), dtype=jnp.float32)
    value = jax.random.normal(kv, (B, H, S, D), dtype=jnp.float32)
    # binary masks (1 = masked out), as in the reference's additive -1e9 trick
    mask_bh = (jax.random.uniform(km, (B, 1, S, S)) > 0.8).astype(jnp.float32)
    mask_ph = (jax.random.uniform(km, (B, H, S, S)) > 0.8).astype(jnp.float32)

    out_nomask = scaled_dot_product_attention(query, key_, value, None)
    out_bh = scaled_dot_product_attention(query, key_, value, mask_bh)
    out_ph = scaled_dot_product_attention(query, key_, value, mask_ph)
    jax.block_until_ready((out_nomask, out_bh, out_ph))

    ref_nomask = _reference_sdpa(query, key_, value, None)
    ref_bh = _reference_sdpa(query, key_, value, mask_bh)
    ref_ph = _reference_sdpa(query, key_, value, mask_ph)

    assert out_nomask.shape == (B, H, S, D)
    assert jnp.allclose(out_nomask, ref_nomask, atol=2e-3, rtol=2e-3)
    assert jnp.allclose(out_bh, ref_bh, atol=2e-3, rtol=2e-3)
    assert jnp.allclose(out_ph, ref_ph, atol=2e-3, rtol=2e-3)

    # Optional bf16-MXU fast path (standard bf16-attention accuracy tradeoff).
    out_bf16 = scaled_dot_product_attention(query, key_, value, mask_bh,
                                            use_bf16_matmul=True)
    jax.block_until_ready(out_bf16)
    assert jnp.allclose(out_bf16, ref_bh, atol=3e-2, rtol=3e-2)

    print("KERNEL_OK")
</pallas_src>

<mosaic_0001>
module attributes {stable_mosaic.version = 11 : i64} {
  func.func @kernel(%arg0: i32, %arg1: i32, %arg2: i32, %arg3: memref<2x8x32xf32, #tpu.memory_space<vmem>>, %arg4: memref<2x8x32xf32, #tpu.memory_space<vmem>>, %arg5: memref<2x8x32xf32, #tpu.memory_space<vmem>>, %arg6: memref<2x8x32xf32, #tpu.memory_space<vmem>>, %arg7: memref<2x8x32xf32, #tpu.memory_space<vmem>>, %arg8: memref<2x8x1xf32, #tpu.memory_space<vmem>>, %arg9: memref<2x8x1xf32, #tpu.memory_space<vmem>>, %arg10: memref<2x8x32xf32, #tpu.memory_space<vmem>>) attributes {dimension_semantics = [#tpu.dimension_semantics<parallel>, #tpu.dimension_semantics<parallel>, #tpu.dimension_semantics<arbitrary>], iteration_bounds = array<i64: 2, 1, 1>, scalar_prefetch = 0 : i64, scratch_operands = 4 : i64, tpu.core_type = #tpu.core_type<tc>, window_params = [{transform_indices = @transform_0, window_bounds = array<i64: 2, 8, 32>}, {transform_indices = @transform_1, window_bounds = array<i64: 2, 8, 32>}, {transform_indices = @transform_2, window_bounds = array<i64: 2, 8, 32>}, {transform_indices = @transform_3, window_bounds = array<i64: 2, 8, 32>}]} {
    %c0_i32 = arith.constant 0 : i32
    %0 = arith.cmpi eq, %arg2, %c0_i32 : i32
    %1 = arith.extui %0 : i1 to i32
    %c0_i32_0 = arith.constant 0 : i32
    %2 = arith.cmpi ne, %1, %c0_i32_0 : i32
    scf.if %2 {
      %c0_32 = arith.constant 0 : index
      %c0_33 = arith.constant 0 : index
      %c0_34 = arith.constant 0 : index
      %32 = vector.load %arg3[%c0_32, %c0_33, %c0_34] : memref<2x8x32xf32, #tpu.memory_space<vmem>>, vector<2x8x32xf32>
      %cst_35 = arith.constant 0.255034864 : f32
      %33 = vector.broadcast %cst_35 : f32 to vector<2x8x32xf32>
      %34 = arith.mulf %32, %33 : vector<2x8x32xf32>
      %c0_36 = arith.constant 0 : index
      %c0_37 = arith.constant 0 : index
      %c0_38 = arith.constant 0 : index
      %35 = vector.load %arg7[%c0_36, %c0_37, %c0_38] : memref<2x8x32xf32, #tpu.memory_space<vmem>>, vector<2x8x32xf32>
      tpu.vector_store %arg7[%c0_36, %c0_37, %c0_38], %34 {strides = array<i32>} : memref<2x8x32xf32, #tpu.memory_space<vmem>>, vector<2x8x32xf32>,
      %cst_39 = arith.constant 0xFF800000 : f32
      %36 = vector.broadcast %cst_39 : f32 to vector<2x8x1xf32>
      %c0_40 = arith.constant 0 : index
      %c0_41 = arith.constant 0 : index
      %c0_42 = arith.constant 0 : index
      %37 = vector.load %arg8[%c0_40, %c0_41, %c0_42] : memref<2x8x1xf32, #tpu.memory_space<vmem>>, vector<2x8x1xf32>
      tpu.vector_store %arg8[%c0_40, %c0_41, %c0_42], %36 {strides = array<i32>} : memref<2x8x1xf32, #tpu.memory_space<vmem>>, vector<2x8x1xf32>,
      %cst_43 = arith.constant 0.000000e+00 : f32
      %38 = vector.broadcast %cst_43 : f32 to vector<2x8x1xf32>
      %c0_44 = arith.constant 0 : index
      %c0_45 = arith.constant 0 : index
      %c0_46 = arith.constant 0 : index
      %39 = vector.load %arg9[%c0_44, %c0_45, %c0_46] : memref<2x8x1xf32, #tpu.memory_space<vmem>>, vector<2x8x1xf32>
      tpu.vector_store %arg9[%c0_44, %c0_45, %c0_46], %38 {strides = array<i32>} : memref<2x8x1xf32, #tpu.memory_space<vmem>>, vector<2x8x1xf32>,
      %cst_47 = arith.constant 0.000000e+00 : f32
      %40 = vector.broadcast %cst_47 : f32 to vector<2x8x32xf32>
      %c0_48 = arith.constant 0 : index
      %c0_49 = arith.constant 0 : index
      %c0_50 = arith.constant 0 : index
      %41 = vector.load %arg10[%c0_48, %c0_49, %c0_50] : memref<2x8x32xf32, #tpu.memory_space<vmem>>, vector<2x8x32xf32>
      tpu.vector_store %arg10[%c0_48, %c0_49, %c0_50], %40 {strides = array<i32>} : memref<2x8x32xf32, #tpu.memory_space<vmem>>, vector<2x8x32xf32>,
    } else {
    }
    %c0 = arith.constant 0 : index
    %c0_1 = arith.constant 0 : index
    %c0_2 = arith.constant 0 : index
    %3 = vector.load %arg4[%c0, %c0_1, %c0_2] : memref<2x8x32xf32, #tpu.memory_space<vmem>>, vector<2x8x32xf32>
    %c0_3 = arith.constant 0 : index
    %c0_4 = arith.constant 0 : index
    %c0_5 = arith.constant 0 : index
    %4 = vector.load %arg7[%c0_3, %c0_4, %c0_5] : memref<2x8x32xf32, #tpu.memory_space<vmem>>, vector<2x8x32xf32>
    "tpu.trace_start"() <{level = 10 : i32, message = "gqd,gkd->gqk"}> : () -> ()
    %cst = arith.constant dense<0.000000e+00> : vector<2x8x8xf32>
    %5 = tpu.matmul %4, %3, %cst {dimension_numbers = #tpu.dot_dimension_numbers<[2], [2], [1], [1], [0, 0, 0, 1, 1, 1], [0], [0]>} : vector<2x8x32xf32>, vector<2x8x32xf32>, vector<2x8x8xf32> -> vector<2x8x8xf32>
    "tpu.trace_stop"() : () -> ()
    %c0_6 = arith.constant 0 : index
    %c0_7 = arith.constant 0 : index
    %c0_8 = arith.constant 0 : index
    %6 = vector.load %arg8[%c0_6, %c0_7, %c0_8] : memref<2x8x1xf32, #tpu.memory_space<vmem>>, vector<2x8x1xf32>
    %cst_9 = arith.constant dense<0xFF800000> : vector<2x8xf32>
    %7 = vector.multi_reduction <maximumf>, %5, %cst_9 [2] : vector<2x8x8xf32> to vector<2x8xf32>
    %8 = vector.shape_cast %7 : vector<2x8xf32> to vector<2x8x1xf32>
    %9 = arith.maximumf %6, %8 : vector<2x8x1xf32>
    %10 = arith.subf %6, %9 : vector<2x8x1xf32>
    %11 = math.exp2 %10 : vector<2x8x1xf32>
    %12 = vector.broadcast %9 : vector<2x8x1xf32> to vector<2x8x8xf32>
    %13 = arith.subf %5, %12 : vector<2x8x8xf32>
    %14 = math.exp2 %13 : vector<2x8x8xf32>
    %c0_10 = arith.constant 0 : index
    %c0_11 = arith.constant 0 : index
    %c0_12 = arith.constant 0 : index
    %15 = vector.load %arg9[%c0_10, %c0_11, %c0_12] : memref<2x8x1xf32, #tpu.memory_space<vmem>>, vector<2x8x1xf32>
    %16 = arith.mulf %11, %15 : vector<2x8x1xf32>
    %cst_13 = arith.constant dense<0.000000e+00> : vector<2x8xf32>
    %17 = vector.multi_reduction <add>, %14, %cst_13 [2] : vector<2x8x8xf32> to vector<2x8xf32>
    %18 = vector.shape_cast %17 : vector<2x8xf32> to vector<2x8x1xf32>
    %19 = arith.addf %16, %18 : vector<2x8x1xf32>
    %c0_14 = arith.constant 0 : index
    %c0_15 = arith.constant 0 : index
    %c0_16 = arith.constant 0 : index
    %20 = vector.load %arg9[%c0_14, %c0_15, %c0_16] : memref<2x8x1xf32, #tpu.memory_space<vmem>>, vector<2x8x1xf32>
    tpu.vector_store %arg9[%c0_14, %c0_15, %c0_16], %19 {strides = array<i32>} : memref<2x8x1xf32, #tpu.memory_space<vmem>>, vector<2x8x1xf32>,
    %c0_17 = arith.constant 0 : index
    %c0_18 = arith.constant 0 : index
    %c0_19 = arith.constant 0 : index
    %21 = vector.load %arg10[%c0_17, %c0_18, %c0_19] : memref<2x8x32xf32, #tpu.memory_space<vmem>>, vector<2x8x32xf32>
    %22 = vector.broadcast %11 : vector<2x8x1xf32> to vector<2x8x32xf32>
    %23 = arith.mulf %22, %21 : vector<2x8x32xf32>
    %c0_20 = arith.constant 0 : index
    %c0_21 = arith.constant 0 : index
    %c0_22 = arith.constant 0 : index
    %24 = vector.load %arg5[%c0_20, %c0_21, %c0_22] : memref<2x8x32xf32, #tpu.memory_space<vmem>>, vector<2x8x32xf32>
    "tpu.trace_start"() <{level = 10 : i32, message = "gqk,gkd->gqd"}> : () -> ()
    %cst_23 = arith.constant dense<0.000000e+00> : vector<2x8x32xf32>
    %25 = tpu.matmul %14, %24, %cst_23 {dimension_numbers = #tpu.dot_dimension_numbers<[2], [1], [1], [2], [0, 0, 0, 1, 1, 2], [0], [0]>} : vector<2x8x8xf32>, vector<2x8x32xf32>, vector<2x8x32xf32> -> vector<2x8x32xf32>
    "tpu.trace_stop"() : () -> ()
    %26 = arith.addf %23, %25 : vector<2x8x32xf32>
    %c0_24 = arith.constant 0 : index
    %c0_25 = arith.constant 0 : index
    %c0_26 = arith.constant 0 : index
    %27 = vector.load %arg10[%c0_24, %c0_25, %c0_26] : memref<2x8x32xf32, #tpu.memory_space<vmem>>, vector<2x8x32xf32>
    tpu.vector_store %arg10[%c0_24, %c0_25, %c0_26], %26 {strides = array<i32>} : memref<2x8x32xf32, #tpu.memory_space<vmem>>, vector<2x8x32xf32>,
    %c0_27 = arith.constant 0 : index
    %c0_28 = arith.constant 0 : index
    %c0_29 = arith.constant 0 : index
    %28 = vector.load %arg8[%c0_27, %c0_28, %c0_29] : memref<2x8x1xf32, #tpu.memory_space<vmem>>, vector<2x8x1xf32>
    tpu.vector_store %arg8[%c0_27, %c0_28, %c0_29], %9 {strides = array<i32>} : memref<2x8x1xf32, #tpu.memory_space<vmem>>, vector<2x8x1xf32>,
    %c0_i32_30 = arith.constant 0 : i32
    %29 = arith.cmpi eq, %arg2, %c0_i32_30 : i32
    %30 = arith.extui %29 : i1 to i32
    %c0_i32_31 = arith.constant 0 : i32
    %31 = arith.cmpi ne, %30, %c0_i32_31 : i32
    scf.if %31 {
      %c0_32 = arith.constant 0 : index
      %c0_33 = arith.constant 0 : index
      %c0_34 = arith.constant 0 : index
      %32 = vector.load %arg9[%c0_32, %c0_33, %c0_34] : memref<2x8x1xf32, #tpu.memory_space<vmem>>, vector<2x8x1xf32>
      %33 = tpu.reciprocal %32 : vector<2x8x1xf32> -> vector<2x8x1xf32>
      %c0_35 = arith.constant 0 : index
      %c0_36 = arith.constant 0 : index
      %c0_37 = arith.constant 0 : index
      %34 = vector.load %arg10[%c0_35, %c0_36, %c0_37] : memref<2x8x32xf32, #tpu.memory_space<vmem>>, vector<2x8x32xf32>
      %35 = vector.broadcast %33 : vector<2x8x1xf32> to vector<2x8x32xf32>
      %36 = arith.mulf %34, %35 : vector<2x8x32xf32>
      %c0_38 = arith.constant 0 : index
      %c0_39 = arith.constant 0 : index
      %c0_40 = arith.constant 0 : index
      %37 = vector.load %arg6[%c0_38, %c0_39, %c0_40] : memref<2x8x32xf32, #tpu.memory_space<vmem>>, vector<2x8x32xf32>
      tpu.vector_store %arg6[%c0_38, %c0_39, %c0_40], %36 {strides = array<i32>} : memref<2x8x32xf32, #tpu.memory_space<vmem>>, vector<2x8x32xf32>,
    } else {
    }
    return
  }
  func.func @transform_0(%arg0: i32, %arg1: i32, %arg2: i32) -> (i32, i32, i32) {
    %c0_i32 = arith.constant 0 : i32
    %c0_i32_0 = arith.constant 0 : i32
    return %arg0, %arg1, %c0_i32 : i32, i32, i32
  }
  func.func @transform_1(%arg0: i32, %arg1: i32, %arg2: i32) -> (i32, i32, i32) {
    %c0_i32 = arith.constant 0 : i32
    %c0_i32_0 = arith.constant 0 : i32
    return %arg0, %arg2, %c0_i32 : i32, i32, i32
  }
  func.func @transform_2(%arg0: i32, %arg1: i32, %arg2: i32) -> (i32, i32, i32) {
    %c0_i32 = arith.constant 0 : i32
    %c0_i32_0 = arith.constant 0 : i32
    return %arg0, %arg2, %c0_i32 : i32, i32, i32
  }
  func.func @transform_3(%arg0: i32, %arg1: i32, %arg2: i32) -> (i32, i32, i32) {
    %c0_i32 = arith.constant 0 : i32
    %c0_i32_0 = arith.constant 0 : i32
    return %arg0, %arg1, %c0_i32 : i32, i32, i32
  }
}

</mosaic_0001>

<llo_original>
// kernel: scaled_dot_product_attention.1
$region0: #{scaled_dot_product_attention.1}
  #allocation0 [shape = 'u32[]', space=smem, size = 0x4, offset = 0x4, fixed_abs, tag = 'smem constant byte address 0x4 - core index']
  #allocation1 [shape = 'u32[144,128]{1,0:T(1,128)}', space=vmem, size = 0x12000, scoped, tag = 'internal scratch']
  #allocation2 [shape = 'f32[2,8,32]{2,1,0:T(8,128)}', space=vmem, size = 0x2000, scoped, tag = 'scratch operand']
  #allocation3 [shape = 'f32[2,8,1]{2,1,0:T(8,128)}', space=vmem, size = 0x2000, scoped, tag = 'scratch operand']
  #allocation4 [shape = 'f32[2,8,1]{2,1,0:T(8,128)}', space=vmem, size = 0x2000, scoped, tag = 'scratch operand']
  #allocation5 [shape = 'f32[2,8,32]{2,1,0:T(8,128)}', space=vmem, size = 0x2000, scoped, tag = 'scratch operand']
  %s0 = inlined_call_operand.hbm [shape: f32[4,8,32], index: 0, kind: input, shape index: {}]
  %s1 = inlined_call_operand.hbm [shape: f32[4,8,32], index: 1, kind: input, shape index: {}]
  %s2 = inlined_call_operand.hbm [shape: f32[4,8,32], index: 2, kind: input, shape index: {}]
  %s3 = inlined_call_operand.hbm [shape: f32[4,8,32], index: 3, kind: output, shape index: {}]
  %s4 = sld [smem:[#allocation0]]
  $region65: #{scaled_dot_product_attention.1} parent=0
    _
  %s6 = ssub.s32 1, %s4
  %s7 = scalar_select 0, %s6, %s4
  $region1: #{scaled_dot_product_attention.1} parent=0
    #allocation6 [shape = 'u8[16384]{0}', space=vmem, size = 0x4000, scoped, tag = 'input window, operand 0']
    #allocation7 [shape = 's32[2]{0}', space=sflag, size = 0x8, scoped, tag = 'scoped memory for scaled_dot_product_attention.1']
    #allocation8 [shape = 's32[2]{0}', space=sflag, size = 0x8, scoped, tag = 'scoped memory for scaled_dot_product_attention.1']
    #allocation9 [shape = 'u8[16384]{0}', space=vmem, size = 0x4000, scoped, tag = 'input window, operand 1']
    #allocation10 [shape = 's32[2]{0}', space=sflag, size = 0x8, scoped, tag = 'scoped memory for scaled_dot_product_attention.1']
    #allocation11 [shape = 'u8[16384]{0}', space=vmem, size = 0x4000, scoped, tag = 'input window, operand 2']
    #allocation12 [shape = 'u8[16384]{0}', space=vmem, size = 0x4000, scoped, tag = 'output window, operand 0']
    %8 = vsyncpa [#allocation7], 0
    %s9 = scalar_lea.sflag [#allocation7], 1
    %10 = vsyncpa %s9, 0
    %11 = vsyncpa [#allocation10], 0
    %s12 = scalar_lea.sflag [#allocation10], 1
    %13 = vsyncpa %s12, 0
    %14 = vsyncpa [#allocation8], 0
    %s15 = scalar_lea.sflag [#allocation8], 1
    %16 = vsyncpa %s15, 0
    loop: start=0, step=1, limit=4
    $region2: #{scaled_dot_product_attention.1} parent=1 // loop_pre_header
      _
    $region3: #{scaled_dot_product_attention.1} parent=1 // loop_header
      %s18 = sphi 0, %s22
      %p19 = scmp.ge.s32.totalorder %s18, 4
      %s25 = sphi 0, %s44
      %s26 = sphi 0, %s40
      %s27 = sphi 0, %s36
      %s28 = sphi 0, %s25
      %s29 = sphi 0, %s26
      %s30 = sphi 0, %s27
      %s31 = sphi 0, %s28
      %s32 = sphi 0, %s29
      %s33 = sphi 0, %s30
      %s49 = sphi 0, %s51
      %s52 = sphi 0, %s49
      %s53 = sphi 0, %s52
      %s69 = sphi 0, %s53
      %s77 = sphi 0, %s79
      %s80 = sphi 0, %s77
      %s81 = sphi 0, %s80
      %s97 = sphi 0, %s81
      %s105 = sphi 0, %s107
      %s108 = sphi 0, %s105
      %s109 = sphi 0, %s108
      %s125 = sphi 0, %s109
      %s133 = sphi 0, %s135
      %s136 = sphi 0, %s133
      %s137 = sphi 0, %s136
      %s153 = sphi 0, %s137
    $region4: #{scaled_dot_product_attention.1} parent=1 // loop_header_branch
      %21 = sbr.rel (%p19) target = $region8
    $region5: #{scaled_dot_product_attention.1} parent=1 // loop_body
      %s23 = ssub.s32 %s18, 1
      %s24 = ssub.s32 %s18, 2
      %s34 = sadd.s32 1, %s27
      %p35 = scmp.ge.s32.totalorder %s34, 1
      %s36 = scalar_select %p35, 0, %s34
      %s37 = sadd.s32 1, %s26
      %s38 = scalar_select %p35, %s37, %s26
      %p39 = scmp.ge.s32.totalorder %s38, 1
      %s40 = scalar_select %p39, 0, %s38
      %s41 = sadd.s32 1, %s25
      %s42 = scalar_select %p39, %s41, %s25
      %p43 = scmp.ge.s32.totalorder %s42, 2
      %s44 = scalar_select %p43, 0, %s42
      %s45 = ssub.s32 %s25, %s44
      %s46 = ssub.s32 %s26, %s40
      %s47 = sor.u32 %s45, %s46
      %p48 = scmp.eq.s32.totalorder %s47, 0
      %s50 = sadd.s32 %s49, 1
      %s51 = scalar_select %p48, %s49, %s50
      %p54 = pneg %p48
      %p55 = scmp.eq.s32.totalorder %s18, 1
      %p56 = por %p54, %p55
      %p57 = scmp.ne.s32.totalorder %s49, %s52
      %p58 = scmp.eq.s32.totalorder %s18, 0
      %p59 = por %p57, %p58
      %p60 = scmp.ne.s32.totalorder %s49, %s52
      %p61 = scmp.eq.s32.totalorder %s23, 1
      %p62 = por %p60, %p61
      %p63 = scmp.ne.s32.totalorder %s52, %s53
      %p64 = scmp.eq.s32.totalorder %s23, 0
      %p65 = por %p63, %p64
      %p66 = scmp.ne.s32.totalorder %s52, %s53
      %p67 = scmp.eq.s32.totalorder %s24, 1
      %p68 = por %p66, %p67
      %p70 = scmp.ne.s32.totalorder %s53, %s69
      %p71 = scmp.eq.s32.totalorder %s24, 0
      %p72 = por %p70, %p71
      %s73 = ssub.s32 %s25, %s44
      %s74 = ssub.s32 %s27, %s36
      %s75 = sor.u32 %s73, %s74
      %p76 = scmp.eq.s32.totalorder %s75, 0
      %s78 = sadd.s32 %s77, 1
      %s79 = scalar_select %p76, %s77, %s78
      %p82 = pneg %p76
      %p83 = scmp.eq.s32.totalorder %s18, 1
      %p84 = por %p82, %p83
      %p85 = scmp.ne.s32.totalorder %s77, %s80
      %p86 = scmp.eq.s32.totalorder %s18, 0
      %p87 = por %p85, %p86
      %p88 = scmp.ne.s32.totalorder %s77, %s80
      %p89 = scmp.eq.s32.totalorder %s23, 1
      %p90 = por %p88, %p89
      %p91 = scmp.ne.s32.totalorder %s80, %s81
      %p92 = scmp.eq.s32.totalorder %s23, 0
      %p93 = por %p91, %p92
      %p94 = scmp.ne.s32.totalorder %s80, %s81
      %p95 = scmp.eq.s32.totalorder %s24, 1
      %p96 = por %p94, %p95
      %p98 = scmp.ne.s32.totalorder %s81, %s97
      %p99 = scmp.eq.s32.totalorder %s24, 0
      %p100 = por %p98, %p99
      %s101 = ssub.s32 %s25, %s44
      %s102 = ssub.s32 %s27, %s36
      %s103 = sor.u32 %s101, %s102
      %p104 = scmp.eq.s32.totalorder %s103, 0
      %s106 = sadd.s32 %s105, 1
      %s107 = scalar_select %p104, %s105, %s106
      %p110 = pneg %p104
      %p111 = scmp.eq.s32.totalorder %s18, 1
      %p112 = por %p110, %p111
      %p113 = scmp.ne.s32.totalorder %s105, %s108
      %p114 = scmp.eq.s32.totalorder %s18, 0
      %p115 = por %p113, %p114
      %p116 = scmp.ne.s32.totalorder %s105, %s108
      %p117 = scmp.eq.s32.totalorder %s23, 1
      %p118 = por %p116, %p117
      %p119 = scmp.ne.s32.totalorder %s108, %s109
      %p120 = scmp.eq.s32.totalorder %s23, 0
      %p121 = por %p119, %p120
      %p122 = scmp.ne.s32.totalorder %s108, %s109
      %p123 = scmp.eq.s32.totalorder %s24, 1
      %p124 = por %p122, %p123
      %p126 = scmp.ne.s32.totalorder %s109, %s125
      %p127 = scmp.eq.s32.totalorder %s24, 0
      %p128 = por %p126, %p127
      %s129 = ssub.s32 %s25, %s44
      %s130 = ssub.s32 %s26, %s40
      %s131 = sor.u32 %s129, %s130
      %p132 = scmp.eq.s32.totalorder %s131, 0
      %s134 = sadd.s32 %s133, 1
      %s135 = scalar_select %p132, %s133, %s134
      %p138 = pneg %p132
      %p139 = scmp.eq.s32.totalorder %s18, 1
      %p140 = por %p138, %p139
      %p141 = scmp.ne.s32.totalorder %s133, %s136
      %p142 = scmp.eq.s32.totalorder %s18, 0
      %p143 = por %p141, %p142
      %p144 = scmp.ne.s32.totalorder %s133, %s136
      %p145 = scmp.eq.s32.totalorder %s23, 1
      %p146 = por %p144, %p145
      %p147 = scmp.ne.s32.totalorder %s136, %s137
      %p148 = scmp.eq.s32.totalorder %s23, 0
      %p149 = por %p147, %p148
      %p150 = scmp.ne.s32.totalorder %s136, %s137
      %p151 = scmp.eq.s32.totalorder %s24, 1
      %p152 = por %p150, %p151
      %p154 = scmp.ne.s32.totalorder %s137, %s153
      %p155 = scmp.eq.s32.totalorder %s24, 0
      %p156 = por %p154, %p155
      %p157 = scmp.le.s32.totalorder 1, %s18
      %p158 = scmp.lt.s32.totalorder %s18, 3
      %p159 = pnand %p157, %p158
      %p160 = pneg %p159
      // Predicated region
      $region9: #{scaled_dot_product_attention.1} parent=5 // pred_check
        _
      $region10: #{scaled_dot_product_attention.1} parent=5 // pred_check_branch
        %162 = sbr.rel (%p159) target = $region12
      $region11: #{scaled_dot_product_attention.1} parent=5 // pred_region
        %s163 = ssub.s32 %s18, 1
      $region12: #{scaled_dot_product_attention.1} parent=5 // pred_fallthru
        _
      %p164 = scmp.lt.s32.totalorder %s18, 2
      // Predicated region
      $region13: #{scaled_dot_product_attention.1} parent=5 // pred_check
        %p165 = pneg %p164
      $region14: #{scaled_dot_product_attention.1} parent=5 // pred_check_branch
        %167 = sbr.rel (%p165) target = $region16
      $region15: #{scaled_dot_product_attention.1} parent=5 // pred_region
        // Predicated region
        $region17: #{scaled_dot_product_attention.1} parent=15 // pred_check
          %p168 = pneg %p59
        $region18: #{scaled_dot_product_attention.1} parent=15 // pred_check_branch
          %170 = sbr.rel (%p168) target = $region20
        $region19: #{scaled_dot_product_attention.1} parent=15 // pred_region
          %s171 = sand.u32 %s49, 1
          %s172 = scalar_lea.sflag [#allocation7], %s171
          %s173 = sand.u32 %s49, 1
          %s174 = smul.addr %s173, 16
          %s175 = scalar_lea.vmem [#allocation6], %s174
          %s176 = smul.u32 2, %s25
          %s178 = ssub.s32 256, 256
          %179 = vsyncadd %s172, %s178
          %s180 = sadd.s32 %s26, %s176
          %s181 = smul.addr %s180, 128
          %s182 = scalar_lea.hbm %s0, %s181
          %s183 = sshll.u32 %s175, 4
          %s184 = int_to_ptr.vmem [resolvable:$true] %s183
          %189 = dma.hbm_to_vmem [thread:$0]  %s182, 256, %s184, %s172, 128, 128, 8
        $region20: #{scaled_dot_product_attention.1} parent=15 // pred_fallthru
          _
        // Predicated region
        $region21: #{scaled_dot_product_attention.1} parent=15 // pred_check
          %p190 = pneg %p87
        $region22: #{scaled_dot_product_attention.1} parent=15 // pred_check_branch
          %192 = sbr.rel (%p190) target = $region24
        $region23: #{scaled_dot_product_attention.1} parent=15 // pred_region
          %s193 = sand.u32 %s18, 1
          %s194 = scalar_lea.sflag [#allocation10], %s193
          %s195 = sand.u32 %s77, 1
          %s196 = smul.addr %s195, 16
          %s197 = scalar_lea.vmem [#allocation9], %s196
          %s198 = smul.u32 2, %s25
          %s200 = ssub.s32 256, 256
          %201 = vsyncadd %s194, %s200
          %s202 = sadd.s32 %s27, %s198
          %s203 = smul.addr %s202, 128
          %s204 = scalar_lea.hbm %s1, %s203
          %s205 = sshll.u32 %s197, 4
          %s206 = int_to_ptr.vmem [resolvable:$true] %s205
          %211 = dma.hbm_to_vmem [thread:$0]  %s204, 256, %s206, %s194, 128, 128, 8
        $region24: #{scaled_dot_product_attention.1} parent=15 // pred_fallthru
          _
        // Predicated region
        $region25: #{scaled_dot_product_attention.1} parent=15 // pred_check
          %p212 = pneg %p115
        $region26: #{scaled_dot_product_attention.1} parent=15 // pred_check_branch
          %214 = sbr.rel (%p212) target = $region28
        $region27: #{scaled_dot_product_attention.1} parent=15 // pred_region
          %s215 = sand.u32 %s18, 1
          %s216 = scalar_lea.sflag [#allocation10], %s215
          %s217 = sand.u32 %s105, 1
          %s218 = smul.addr %s217, 16
          %s219 = scalar_lea.vmem [#allocation11], %s218
          %s220 = smul.u32 2, %s25
          %s222 = ssub.s32 256, 256
          %223 = vsyncadd %s216, %s222
          %s224 = sadd.s32 %s27, %s220
          %s225 = smul.addr %s224, 128
          %s226 = scalar_lea.hbm %s2, %s225
          %s227 = sshll.u32 %s219, 4
          %s228 = int_to_ptr.vmem [resolvable:$true] %s227
          %233 = dma.hbm_to_vmem [thread:$0]  %s226, 256, %s228, %s216, 128, 128, 8
        $region28: #{scaled_dot_product_attention.1} parent=15 // pred_fallthru
          _
      $region16: #{scaled_dot_product_attention.1} parent=5 // pred_fallthru
        _
      %p234 = scmp.le.s32.totalorder 1, %s18
      %p235 = scmp.lt.s32.totalorder %s18, 3
      %p236 = pnand %p234, %p235
      %p237 = pneg %p236
      // Predicated region
      $region29: #{scaled_dot_product_attention.1} parent=5 // pred_check
        _
      $region30: #{scaled_dot_product_attention.1} parent=5 // pred_check_branch
        %239 = sbr.rel (%p236) target = $region32
      $region31: #{scaled_dot_product_attention.1} parent=5 // pred_region
        %s240 = ssub.s32 %s18, 1
        %s241 = sand.u32 %s52, 1
        %s242 = scalar_lea.sflag [#allocation7], %s241
        %s243 = sand.u32 %s52, 1
        %s244 = smul.addr %s243, 16
        %s245 = scalar_lea.vmem [#allocation6], %s244
        // Predicated region
        $region33: #{scaled_dot_product_attention.1} parent=31 // pred_check
          %p246 = pneg %p65
        $region34: #{scaled_dot_product_attention.1} parent=31 // pred_check_branch
          %248 = sbr.rel (%p246) target = $region36
        $region35: #{scaled_dot_product_attention.1} parent=31 // pred_region
          %249 = dma.done %s242, 256
        $region36: #{scaled_dot_product_attention.1} parent=31 // pred_fallthru
          _
        %s250 = sand.u32 %s23, 1
        %s251 = scalar_lea.sflag [#allocation10], %s250
        %s252 = sand.u32 %s80, 1
        %s253 = smul.addr %s252, 16
        %s254 = scalar_lea.vmem [#allocation9], %s253
        // Predicated region
        $region37: #{scaled_dot_product_attention.1} parent=31 // pred_check
          %p255 = pneg %p93
        $region38: #{scaled_dot_product_attention.1} parent=31 // pred_check_branch
          %257 = sbr.rel (%p255) target = $region40
        $region39: #{scaled_dot_product_attention.1} parent=31 // pred_region
          %258 = dma.done %s251, 256
        $region40: #{scaled_dot_product_attention.1} parent=31 // pred_fallthru
          _
        %s259 = sand.u32 %s23, 1
        %s260 = scalar_lea.sflag [#allocation10], %s259
        %s261 = sand.u32 %s108, 1
        %s262 = smul.addr %s261, 16
        %s263 = scalar_lea.vmem [#allocation11], %s262
        // Predicated region
        $region41: #{scaled_dot_product_attention.1} parent=31 // pred_check
          %p264 = pneg %p121
        $region42: #{scaled_dot_product_attention.1} parent=31 // pred_check_branch
          %266 = sbr.rel (%p264) target = $region44
        $region43: #{scaled_dot_product_attention.1} parent=31 // pred_region
          %267 = dma.done %s260, 256
        $region44: #{scaled_dot_product_attention.1} parent=31 // pred_fallthru
          _
        %s268 = sand.u32 %s52, 1
        %s269 = scalar_lea.sflag [#allocation7], %s268
        %s270 = sand.u32 %s52, 1
        %s271 = smul.addr %s270, 16
        %s272 = scalar_lea.vmem [#allocation6], %s271
        %p273 = pneg %p65
        %p274 = pneg %p62
        %s275 = sand.u32 %s23, 1
        %s276 = scalar_lea.sflag [#allocation10], %s275
        %s277 = sand.u32 %s80, 1
        %s278 = smul.addr %s277, 16
        %s279 = scalar_lea.vmem [#allocation9], %s278
        %p280 = pneg %p93
        %p281 = pneg %p90
        %s282 = sand.u32 %s23, 1
        %s283 = scalar_lea.sflag [#allocation10], %s282
        %s284 = sand.u32 %s108, 1
        %s285 = smul.addr %s284, 16
        %s286 = scalar_lea.vmem [#allocation11], %s285
        %p287 = pneg %p121
        %p288 = pneg %p118
        %p289 = pneg %p149
        %p290 = pneg %p146
        %s291 = sand.u32 %s136, 1
        %s292 = scalar_lea.sflag [#allocation8], %s291
        %s293 = sand.u32 %s136, 1
        %s294 = smul.addr %s293, 16
        %s295 = scalar_lea.vmem [#allocation12], %s294
        %s296 = smul.u32 2, %s28
        %s297 = smul.u32 2, %s28
        %s298 = smul.u32 2, %s28
        %s299 = smul.u32 2, %s28
        %p300 = scmp.eq.s32.totalorder %s30, 0
        // Predicated region
        $region45: #{scaled_dot_product_attention.1} parent=31 // pred_check
          %p301 = pneg %p300
        $region46: #{scaled_dot_product_attention.1} parent=31 // pred_check_branch
          %303 = sbr.rel (%p301) target = $region48
        $region47: #{scaled_dot_product_attention.1} parent=31 // pred_region
          %v304 = vld [vmem:[%s245] sm:$0xff]
          %v305 = vld [vmem:[%s245 + $0x8] sm:$0xff]
          %v306 = vmul.f32 %v304, 0.25503486
          %v307 = vmul.f32 %v305, 0.25503486
          %vm308 = vcmask 261120
          %309 = vst.msk [vmem:[#allocation2] sm:$0xff] %vm308, %v306
          %310 = vst.msk [vmem:[#allocation2 + $0x8] sm:$0xff] %vm308, %v307
          %vm311 = vcmask 7168
          %312 = vst.msk [vmem:[#allocation3] sm:$0xff] %vm311, -inf
          %313 = vst.msk [vmem:[#allocation3 + $0x8] sm:$0xff] %vm311, -inf
          %314 = vst.msk [vmem:[#allocation4] sm:$0xff] %vm311, 0.0
          %315 = vst.msk [vmem:[#allocation4 + $0x8] sm:$0xff] %vm311, 0.0
          %316 = vst.msk [vmem:[#allocation5] sm:$0xff] %vm308, 0.0
          %317 = vst.msk [vmem:[#allocation5 + $0x8] sm:$0xff] %vm308, 0.0
        $region48: #{scaled_dot_product_attention.1} parent=31 // pred_fallthru
          _
        %v318 = vld [vmem:[%s254] sm:$0xff]
        %v319 = vld [vmem:[%s254 + $0x8] sm:$0xff]
        %v320 = vld [vmem:[#allocation2] sm:$0xff]
        %v321 = vld [vmem:[#allocation2 + $0x8] sm:$0xff]
        %vm322 = vcmask 261120
        %v324 = vsel %vm322, %v320, 0
        %v327 = vsel %vm322, %v318, 0
        %329 = vmatprep.subr.mxu0 0.0
        %330 = vmatpush1.xpose.msra.mxu0 0.0
        %331 = vmatprep.subr.mxu0 0.0
        %332 = vmatpush1.xpose.msra.mxu0 0.0
        %333 = vmatprep.subr.mxu0 0.0
        %334 = vmatpush1.xpose.msra.mxu0 0.0
        %335 = vmatprep.subr.mxu0 0.0
        %336 = vmatpush1.xpose.msra.mxu0 0.0
        %337 = vmatprep.subr.mxu0 0.0
        %338 = vmatpush1.xpose.msra.mxu0 0.0
        %339 = vmatprep.subr.mxu0 0.0
        %340 = vmatpush1.xpose.msra.mxu0 0.0
        %341 = vmatprep.subr.mxu0 0.0
        %342 = vmatpush1.xpose.msra.mxu0 0.0
        %343 = vmatprep.subr.mxu0 0.0
        %344 = vmatpush1.xpose.msra.mxu0 0.0
        %345 = vmatprep.subr.mxu0 0.0
        %346 = vmatpush1.xpose.msra.mxu0 0.0
        %347 = vmatprep.subr.mxu0 0.0
        %348 = vmatpush1.xpose.msra.mxu0 0.0
        %349 = vmatprep.subr.mxu0 0.0
        %350 = vmatpush1.xpose.msra.mxu0 0.0
        %351 = vmatprep.subr.mxu0 0.0
        %352 = vmatpush1.xpose.msra.mxu0 0.0
        %353 = vmatprep.subr.mxu0 0.0
        %354 = vmatpush1.xpose.msra.mxu0 0.0
        %355 = vmatprep.subr.mxu0 0.0
        %356 = vmatpush1.xpose.msra.mxu0 0.0
        %357 = vmatprep.subr.mxu0 0.0
        %358 = vmatpush1.xpose.msra.mxu0 0.0
        %359 = vmatprep.subr.mxu0 0.0
        %360 = vmatpush1.xpose.msra.mxu0 %v327
        %361 = vmatprep.subr.mxu0 0.0
        %362 = vmatpush2.xpose.msra.mxu0 0.0
        %363 = vmatprep.subr.mxu0 0.0
        %364 = vmatpush2.xpose.msra.mxu0 0.0
        %365 = vmatprep.subr.mxu0 0.0
        %366 = vmatpush2.xpose.msra.mxu0 0.0
        %367 = vmatprep.subr.mxu0 0.0
        %368 = vmatpush2.xpose.msra.mxu0 0.0
        %369 = vmatprep.subr.mxu0 0.0
        %370 = vmatpush2.xpose.msra.mxu0 0.0
        %371 = vmatprep.subr.mxu0 0.0
        %372 = vmatpush2.xpose.msra.mxu0 0.0
        %373 = vmatprep.subr.mxu0 0.0
        %374 = vmatpush2.xpose.msra.mxu0 0.0
        %375 = vmatprep.subr.mxu0 0.0
        %376 = vmatpush2.xpose.msra.mxu0 0.0
        %377 = vmatprep.subr.mxu0 0.0
        %378 = vmatpush2.xpose.msra.mxu0 0.0
        %379 = vmatprep.subr.mxu0 0.0
        %380 = vmatpush2.xpose.msra.mxu0 0.0
        %381 = vmatprep.subr.mxu0 0.0
        %382 = vmatpush2.xpose.msra.mxu0 0.0
        %383 = vmatprep.subr.mxu0 0.0
        %384 = vmatpush2.xpose.msra.mxu0 0.0
        %385 = vmatprep.subr.mxu0 0.0
        %386 = vmatpush2.xpose.msra.mxu0 0.0
        %387 = vmatprep.subr.mxu0 0.0
        %388 = vmatpush2.xpose.msra.mxu0 0.0
        %389 = vmatprep.subr.mxu0 0.0
        %390 = vmatpush2.xpose.msra.mxu0 0.0
        %391 = vmatprep.subr.mxu0 0.0
        %392 = vmatpush2.xpose.msra.mxu0 0.0
        %393 = vmatprep.mubr.f32.mxu0 0.0
        %394 = vmatmul.mubr.f32.gmra.mxu0 %v324
        %v395 = vpop.f32.mrf.mxu0
        %v396 = vadd.f32 0.0, %v395
        %v397 = vpop.f32.mrf.mxu0
        %398 = vdwg.mxu0
        %v400 = vsel %vm322, %v321, 0
        %v403 = vsel %vm322, %v319, 0
        %405 = vmatprep.subr.mxu0 0.0
        %406 = vmatpush1.xpose.msra.mxu0 0.0
        %407 = vmatprep.subr.mxu0 0.0
        %408 = vmatpush1.xpose.msra.mxu0 0.0
        %409 = vmatprep.subr.mxu0 0.0
        %410 = vmatpush1.xpose.msra.mxu0 0.0
        %411 = vmatprep.subr.mxu0 0.0
        %412 = vmatpush1.xpose.msra.mxu0 0.0
        %413 = vmatprep.subr.mxu0 0.0
        %414 = vmatpush1.xpose.msra.mxu0 0.0
        %415 = vmatprep.subr.mxu0 0.0
        %416 = vmatpush1.xpose.msra.mxu0 0.0
        %417 = vmatprep.subr.mxu0 0.0
        %418 = vmatpush1.xpose.msra.mxu0 0.0
        %419 = vmatprep.subr.mxu0 0.0
        %420 = vmatpush1.xpose.msra.mxu0 0.0
        %421 = vmatprep.subr.mxu0 0.0
        %422 = vmatpush1.xpose.msra.mxu0 0.0
        %423 = vmatprep.subr.mxu0 0.0
        %424 = vmatpush1.xpose.msra.mxu0 0.0
        %425 = vmatprep.subr.mxu0 0.0
        %426 = vmatpush1.xpose.msra.mxu0 0.0
        %427 = vmatprep.subr.mxu0 0.0
        %428 = vmatpush1.xpose.msra.mxu0 0.0
        %429 = vmatprep.subr.mxu0 0.0
        %430 = vmatpush1.xpose.msra.mxu0 0.0
        %431 = vmatprep.subr.mxu0 0.0
        %432 = vmatpush1.xpose.msra.mxu0 0.0
        %433 = vmatprep.subr.mxu0 0.0
        %434 = vmatpush1.xpose.msra.mxu0 0.0
        %435 = vmatprep.subr.mxu0 0.0
        %436 = vmatpush1.xpose.msra.mxu0 %v403
        %437 = vmatprep.subr.mxu0 0.0
        %438 = vmatpush2.xpose.msra.mxu0 0.0
        %439 = vmatprep.subr.mxu0 0.0
        %440 = vmatpush2.xpose.msra.mxu0 0.0
        %441 = vmatprep.subr.mxu0 0.0
        %442 = vmatpush2.xpose.msra.mxu0 0.0
        %443 = vmatprep.subr.mxu0 0.0
        %444 = vmatpush2.xpose.msra.mxu0 0.0
        %445 = vmatprep.subr.mxu0 0.0
        %446 = vmatpush2.xpose.msra.mxu0 0.0
        %447 = vmatprep.subr.mxu0 0.0
        %448 = vmatpush2.xpose.msra.mxu0 0.0
        %449 = vmatprep.subr.mxu0 0.0
        %450 = vmatpush2.xpose.msra.mxu0 0.0
        %451 = vmatprep.subr.mxu0 0.0
        %452 = vmatpush2.xpose.msra.mxu0 0.0
        %453 = vmatprep.subr.mxu0 0.0
        %454 = vmatpush2.xpose.msra.mxu0 0.0
        %455 = vmatprep.subr.mxu0 0.0
        %456 = vmatpush2.xpose.msra.mxu0 0.0
        %457 = vmatprep.subr.mxu0 0.0
        %458 = vmatpush2.xpose.msra.mxu0 0.0
        %459 = vmatprep.subr.mxu0 0.0
        %460 = vmatpush2.xpose.msra.mxu0 0.0
        %461 = vmatprep.subr.mxu0 0.0
        %462 = vmatpush2.xpose.msra.mxu0 0.0
        %463 = vmatprep.subr.mxu0 0.0
        %464 = vmatpush2.xpose.msra.mxu0 0.0
        %465 = vmatprep.subr.mxu0 0.0
        %466 = vmatpush2.xpose.msra.mxu0 0.0
        %467 = vmatprep.subr.mxu0 0.0
        %468 = vmatpush2.xpose.msra.mxu0 0.0
        %469 = vmatprep.mubr.f32.mxu0 0.0
        %470 = vmatmul.mubr.f32.gmra.mxu0 %v400
        %v471 = vpop.f32.mrf.mxu0
        %v472 = vadd.f32 0.0, %v471
        %v473 = vpop.f32.mrf.mxu0
        %474 = vdwg.mxu0
        %v475 = vld [vmem:[#allocation3] sm:$0xff]
        %v476 = vld [vmem:[#allocation3 + $0x8] sm:$0xff]
        %vm477 = vcmask 64512
        %v478 = vsel %vm477, %v396, -inf
        %479 = vmax.xlane.f32.xlu0 %v478
        %v480 = vpop.xlane.xlu0 %479
        %v481 = vsel %vm477, %v472, -inf
        %482 = vmax.xlane.f32.xlu0 %v481
        %v483 = vpop.xlane.xlu0 %482
        %v484 = vmax.f32 %v475, %v480
        %v485 = vmax.f32 %v476, %v483
        %v486 = vsub.f32 %v475, %v484
        %v487 = vsub.f32 %v476, %v485
        %v488 = vpow.pop %v486
        %v489 = vpow.pop %v487
        %491 = vset.pattern.permute.xlu0 0
        %492 = vperm.xlu0 %491, %v484
        %v493 = vpop.permute.xlu0 %492
        %496 = vset.pattern.permute.xlu0 0
        %497 = vperm.xlu0 %496, %v485
        %v498 = vpop.permute.xlu0 %497
        %v500 = vsub.f32 %v396, %v493
        %v501 = vsub.f32 %v472, %v498
        %v502 = vpow.pop %v500
        %v503 = vpow.pop %v501
        %v504 = vld [vmem:[#allocation4] sm:$0xff]
        %v505 = vld [vmem:[#allocation4 + $0x8] sm:$0xff]
        %v506 = vmul.f32 %v488, %v504
        %v507 = vmul.f32 %v489, %v505
        %v508 = vsel %vm477, %v502, 0.0
        %509 = vadd.xlane.f32.xlu0 %v508
        %v510 = vpop.xlane.xlu0 %509
        %v511 = vsel %vm477, %v503, 0.0
        %512 = vadd.xlane.f32.xlu0 %v511
        %v513 = vpop.xlane.xlu0 %512
        %v514 = vadd.f32 %v506, %v510
        %v515 = vadd.f32 %v507, %v513
        %vm516 = vcmask 7168
        %517 = vst.msk [vmem:[#allocation4] sm:$0xff] %vm516, %v514
        %518 = vst.msk [vmem:[#allocation4 + $0x8] sm:$0xff] %vm516, %v515
        %v519 = vld [vmem:[#allocation5] sm:$0xff]
        %v520 = vld [vmem:[#allocation5 + $0x8] sm:$0xff]
        %522 = vset.pattern.permute.xlu0 0
        %523 = vperm.xlu0 %522, %v488
        %v524 = vpop.permute.xlu0 %523
        %527 = vset.pattern.permute.xlu0 0
        %528 = vperm.xlu0 %527, %v489
        %v529 = vpop.permute.xlu0 %528
        %v531 = vmul.f32 %v524, %v519
        %v532 = vmul.f32 %v529, %v520
        %v533 = vld [vmem:[%s263] sm:$0xff]
        %v534 = vld [vmem:[%s263 + $0x8] sm:$0xff]
        %v536 = vsel %vm477, %v502, 0
        %538 = vmatprep.subr.mxu0 0.0
        %539 = vmatpush1.msra.mxu0 0.0
        %540 = vmatprep.subr.mxu0 0.0
        %541 = vmatpush1.msra.mxu0 0.0
        %542 = vmatprep.subr.mxu0 0.0
        %543 = vmatpush1.msra.mxu0 0.0
        %544 = vmatprep.subr.mxu0 0.0
        %545 = vmatpush1.msra.mxu0 0.0
        %546 = vmatprep.subr.mxu0 0.0
        %547 = vmatpush1.msra.mxu0 0.0
        %548 = vmatprep.subr.mxu0 0.0
        %549 = vmatpush1.msra.mxu0 0.0
        %550 = vmatprep.subr.mxu0 0.0
        %551 = vmatpush1.msra.mxu0 0.0
        %552 = vmatprep.subr.mxu0 0.0
        %553 = vmatpush1.msra.mxu0 0.0
        %554 = vmatprep.subr.mxu0 0.0
        %555 = vmatpush1.msra.mxu0 0.0
        %556 = vmatprep.subr.mxu0 0.0
        %557 = vmatpush1.msra.mxu0 0.0
        %558 = vmatprep.subr.mxu0 0.0
        %559 = vmatpush1.msra.mxu0 0.0
        %560 = vmatprep.subr.mxu0 0.0
        %561 = vmatpush1.msra.mxu0 0.0
        %562 = vmatprep.subr.mxu0 0.0
        %563 = vmatpush1.msra.mxu0 0.0
        %564 = vmatprep.subr.mxu0 0.0
        %565 = vmatpush1.msra.mxu0 0.0
        %566 = vmatprep.subr.mxu0 0.0
        %567 = vmatpush1.msra.mxu0 0.0
        %568 = vmatprep.subr.mxu0 0.0
        %569 = vmatpush1.msra.mxu0 %v533
        %570 = vmatprep.subr.mxu0 0.0
        %571 = vmatpush2.msra.mxu0 0.0
        %572 = vmatprep.subr.mxu0 0.0
        %573 = vmatpush2.msra.mxu0 0.0
        %574 = vmatprep.subr.mxu0 0.0
        %575 = vmatpush2.msra.mxu0 0.0
        %576 = vmatprep.subr.mxu0 0.0
        %577 = vmatpush2.msra.mxu0 0.0
        %578 = vmatprep.subr.mxu0 0.0
        %579 = vmatpush2.msra.mxu0 0.0
        %580 = vmatprep.subr.mxu0 0.0
        %581 = vmatpush2.msra.mxu0 0.0
        %582 = vmatprep.subr.mxu0 0.0
        %583 = vmatpush2.msra.mxu0 0.0
        %584 = vmatprep.subr.mxu0 0.0
        %585 = vmatpush2.msra.mxu0 0.0
        %586 = vmatprep.subr.mxu0 0.0
        %587 = vmatpush2.msra.mxu0 0.0
        %588 = vmatprep.subr.mxu0 0.0
        %589 = vmatpush2.msra.mxu0 0.0
        %590 = vmatprep.subr.mxu0 0.0
        %591 = vmatpush2.msra.mxu0 0.0
        %592 = vmatprep.subr.mxu0 0.0
        %593 = vmatpush2.msra.mxu0 0.0
        %594 = vmatprep.subr.mxu0 0.0
        %595 = vmatpush2.msra.mxu0 0.0
        %596 = vmatprep.subr.mxu0 0.0
        %597 = vmatpush2.msra.mxu0 0.0
        %598 = vmatprep.subr.mxu0 0.0
        %599 = vmatpush2.msra.mxu0 0.0
        %600 = vmatprep.subr.mxu0 0.0
        %601 = vmatpush2.msra.mxu0 0.0
        %602 = vmatprep.mubr.f32.mxu0 0.0
        %603 = vmatmul.mubr.f32.gmra.mxu0 %v536
        %v604 = vpop.f32.mrf.mxu0
        %v605 = vadd.f32 0.0, %v604
        %v606 = vpop.f32.mrf.mxu0
        %607 = vdwg.mxu0
        %v609 = vsel %vm477, %v503, 0
        %611 = vmatprep.subr.mxu0 0.0
        %612 = vmatpush1.msra.mxu0 0.0
        %613 = vmatprep.subr.mxu0 0.0
        %614 = vmatpush1.msra.mxu0 0.0
        %615 = vmatprep.subr.mxu0 0.0
        %616 = vmatpush1.msra.mxu0 0.0
        %617 = vmatprep.subr.mxu0 0.0
        %618 = vmatpush1.msra.mxu0 0.0
        %619 = vmatprep.subr.mxu0 0.0
        %620 = vmatpush1.msra.mxu0 0.0
        %621 = vmatprep.subr.mxu0 0.0
        %622 = vmatpush1.msra.mxu0 0.0
        %623 = vmatprep.subr.mxu0 0.0
        %624 = vmatpush1.msra.mxu0 0.0
        %625 = vmatprep.subr.mxu0 0.0
        %626 = vmatpush1.msra.mxu0 0.0
        %627 = vmatprep.subr.mxu0 0.0
        %628 = vmatpush1.msra.mxu0 0.0
        %629 = vmatprep.subr.mxu0 0.0
        %630 = vmatpush1.msra.mxu0 0.0
        %631 = vmatprep.subr.mxu0 0.0
        %632 = vmatpush1.msra.mxu0 0.0
        %633 = vmatprep.subr.mxu0 0.0
        %634 = vmatpush1.msra.mxu0 0.0
        %635 = vmatprep.subr.mxu0 0.0
        %636 = vmatpush1.msra.mxu0 0.0
        %637 = vmatprep.subr.mxu0 0.0
        %638 = vmatpush1.msra.mxu0 0.0
        %639 = vmatprep.subr.mxu0 0.0
        %640 = vmatpush1.msra.mxu0 0.0
        %641 = vmatprep.subr.mxu0 0.0
        %642 = vmatpush1.msra.mxu0 %v534
        %643 = vmatprep.subr.mxu0 0.0
        %644 = vmatpush2.msra.mxu0 0.0
        %645 = vmatprep.subr.mxu0 0.0
        %646 = vmatpush2.msra.mxu0 0.0
        %647 = vmatprep.subr.mxu0 0.0
        %648 = vmatpush2.msra.mxu0 0.0
        %649 = vmatprep.subr.mxu0 0.0
        %650 = vmatpush2.msra.mxu0 0.0
        %651 = vmatprep.subr.mxu0 0.0
        %652 = vmatpush2.msra.mxu0 0.0
        %653 = vmatprep.subr.mxu0 0.0
        %654 = vmatpush2.msra.mxu0 0.0
        %655 = vmatprep.subr.mxu0 0.0
        %656 = vmatpush2.msra.mxu0 0.0
        %657 = vmatprep.subr.mxu0 0.0
        %658 = vmatpush2.msra.mxu0 0.0
        %659 = vmatprep.subr.mxu0 0.0
        %660 = vmatpush2.msra.mxu0 0.0
        %661 = vmatprep.subr.mxu0 0.0
        %662 = vmatpush2.msra.mxu0 0.0
        %663 = vmatprep.subr.mxu0 0.0
        %664 = vmatpush2.msra.mxu0 0.0
        %665 = vmatprep.subr.mxu0 0.0
        %666 = vmatpush2.msra.mxu0 0.0
        %667 = vmatprep.subr.mxu0 0.0
        %668 = vmatpush2.msra.mxu0 0.0
        %669 = vmatprep.subr.mxu0 0.0
        %670 = vmatpush2.msra.mxu0 0.0
        %671 = vmatprep.subr.mxu0 0.0
        %672 = vmatpush2.msra.mxu0 0.0
        %673 = vmatprep.subr.mxu0 0.0
        %674 = vmatpush2.msra.mxu0 0.0
        %675 = vmatprep.mubr.f32.mxu0 0.0
        %676 = vmatmul.mubr.f32.gmra.mxu0 %v609
        %v677 = vpop.f32.mrf.mxu0
        %v678 = vadd.f32 0.0, %v677
        %v679 = vpop.f32.mrf.mxu0
        %680 = vdwg.mxu0
        %v681 = vadd.f32 %v531, %v605
        %v682 = vadd.f32 %v532, %v678
        %683 = vst.msk [vmem:[#allocation5] sm:$0xff] %vm322, %v681
        %684 = vst.msk [vmem:[#allocation5 + $0x8] sm:$0xff] %vm322, %v682
        %685 = vst.msk [vmem:[#allocation3] sm:$0xff] %vm516, %v484
        %686 = vst.msk [vmem:[#allocation3 + $0x8] sm:$0xff] %vm516, %v485
        // Predicated region
        $region49: #{scaled_dot_product_attention.1} parent=31 // pred_check
          %p687 = pneg %p300
        $region50: #{scaled_dot_product_attention.1} parent=31 // pred_check_branch
          %689 = sbr.rel (%p687) target = $region52
        $region51: #{scaled_dot_product_attention.1} parent=31 // pred_region
          %v690 = vld [vmem:[#allocation4] sm:$0xff]
          %v691 = vld [vmem:[#allocation4 + $0x8] sm:$0xff]
          %v692 = vrcp.pop %v690
          %v693 = vrcp.pop %v691
          %v694 = vld [vmem:[#allocation5] sm:$0xff]
          %v695 = vld [vmem:[#allocation5 + $0x8] sm:$0xff]
          %697 = vset.pattern.permute.xlu0 0
          %698 = vperm.xlu0 %697, %v692
          %v699 = vpop.permute.xlu0 %698
          %702 = vset.pattern.permute.xlu0 0
          %703 = vperm.xlu0 %702, %v693
          %v704 = vpop.permute.xlu0 %703
          %v706 = vmul.f32 %v694, %v699
          %v707 = vmul.f32 %v695, %v704
          %708 = vst.msk [vmem:[%s295] sm:$0xff] %vm322, %v706
          %709 = vst.msk [vmem:[%s295 + $0x8] sm:$0xff] %vm322, %v707
        $region52: #{scaled_dot_product_attention.1} parent=31 // pred_fallthru
          _
        %s710 = sand.u32 %s136, 1
        %s711 = scalar_lea.sflag [#allocation8], %s710
        %s712 = sand.u32 %s136, 1
        %s713 = smul.addr %s712, 16
        %s714 = scalar_lea.vmem [#allocation12], %s713
        // Predicated region
        $region53: #{scaled_dot_product_attention.1} parent=31 // pred_check
          %p715 = pneg %p146
        $region54: #{scaled_dot_product_attention.1} parent=31 // pred_check_branch
          %717 = sbr.rel (%p715) target = $region56
        $region55: #{scaled_dot_product_attention.1} parent=31 // pred_region
          %s718 = smul.u32 2, %s28
          %s720 = ssub.s32 256, 256
          %721 = vsyncadd %s711, %s720
          %s722 = sadd.s32 %s29, %s718
          %s723 = smul.addr %s722, 128
          %s724 = scalar_lea.hbm %s3, %s723
          %s725 = sshll.u32 %s714, 4
          %s726 = int_to_ptr.vmem [resolvable:$true] %s725
          %731 = dma.vmem_to_hbm [thread:$0]  %s726, 256, %s724, %s711, 128, 128, 8
        $region56: #{scaled_dot_product_attention.1} parent=31 // pred_fallthru
          _
      $region32: #{scaled_dot_product_attention.1} parent=5 // pred_fallthru
        _
      %p732 = scmp.le.s32.totalorder 2, %s18
      // Predicated region
      $region57: #{scaled_dot_product_attention.1} parent=5 // pred_check
        %p733 = pneg %p732
      $region58: #{scaled_dot_product_attention.1} parent=5 // pred_check_branch
        %735 = sbr.rel (%p733) target = $region60
      $region59: #{scaled_dot_product_attention.1} parent=5 // pred_region
        %s736 = ssub.s32 %s18, 2
        // Predicated region
        $region61: #{scaled_dot_product_attention.1} parent=59 // pred_check
          %p737 = pneg %p152
        $region62: #{scaled_dot_product_attention.1} parent=59 // pred_check_branch
          %739 = sbr.rel (%p737) target = $region64
        $region63: #{scaled_dot_product_attention.1} parent=59 // pred_region
          %s740 = sand.u32 %s137, 1
          %s741 = scalar_lea.sflag [#allocation8], %s740
          %s742 = sand.u32 %s137, 1
          %s743 = smul.addr %s742, 16
          %s744 = scalar_lea.vmem [#allocation12], %s743
          %745 = dma.done %s741, 256
        $region64: #{scaled_dot_product_attention.1} parent=59 // pred_fallthru
          _
      $region60: #{scaled_dot_product_attention.1} parent=5 // pred_fallthru
        _
    $region6: #{scaled_dot_product_attention.1} parent=1 // loop_footer
      %s22 = sadd.s32 1, %s18
    $region7: #{scaled_dot_product_attention.1} parent=1 // loop_footer_branch
      %17 = sbr.rel target = $region3
    $region8: #{scaled_dot_product_attention.1} parent=1 // loop_exit
      _
    %746 = vsyncpa [#allocation7], 1
    %s747 = scalar_lea.sflag [#allocation7], 1
    %748 = vsyncpa %s747, 1
    %749 = vsyncpa [#allocation10], 1
    %s750 = scalar_lea.sflag [#allocation10], 1
    %751 = vsyncpa %s750, 1
    %752 = vsyncpa [#allocation8], 1
    %s753 = scalar_lea.sflag [#allocation8], 1
    %754 = vsyncpa %s753, 1

</llo_original>
